<compile_context>
chip_gen: v7x
topology: tpu7x:2x2x1
jax: 0.10.0
libtpu: 0.0.40
codegen_flags: <defaults>
</compile_context>

<pallas_src>
import functools
import math

import jax
import jax.numpy as jnp
from jax import lax
from jax.experimental import pallas as pl
from jax.experimental.pallas import tpu as pltpu


def get_bond_feature_dims():
    # OGB bond feature vocabulary sizes (bond type, stereo, is_conjugated).
    return [5, 6, 2]


def _round_up(x, m):
    return ((x + m - 1) // m) * m


def _default_tile_n():
    """Generation-aware row tile.

    Big enough to keep the ~0.35 us per-grid-step overhead under ~20% of the
    step, small enough that (lane-padded x tile + out tile) x 2 buffers stays
    inside the default scoped VMEM (v5e ~16 MiB, v6e/v7x ~32 MiB).
    """
    try:
        kind = jax.devices()[0].device_kind.lower()
    except Exception:  # pragma: no cover - defensive; fall back to safe tile
        return 2048
    if "v7" in kind:
        return 8192   # 3.2 TB/s HBM: per-step DMA is tiny, overhead dominates otherwise
    if "v6" in kind:
        return 4096   # ~8 MiB double-buffered footprint, well inside 32 MiB scoped
    return 2048       # v5e / unknown: 16 MiB scoped VMEM, lane-padded x tile counts


def _bond_encoder_kernel(x_ref, w_ref, b_ref, o_ref):
    """One row-tile of y = x @ W_t + b; f32 MXU accumulation, fused bias add."""
    y = jnp.dot(
        x_ref[...], w_ref[...],
        preferred_element_type=jnp.float32,
        precision=lax.Precision.HIGHEST,   # match f32 nn.Linear; free when HBM-bound
    )
    y = y + b_ref[...]                     # (1, emb) bias broadcasts over rows
    o_ref[...] = y.astype(o_ref.dtype)


def bond_encoder_forward(x, w_t, b, *, tile_n=None, out_dtype=None):
    """x: (N, in_features), w_t: (in_features, emb_dim) pre-transposed, b: (emb_dim,)."""
    n, k = x.shape
    emb = w_t.shape[1]
    b2 = b.reshape(1, emb)
    if out_dtype is None:
        out_dtype = x.dtype
    if tile_n is None:
        tile_n = _default_tile_n()

    # Row tile: multiple of 8 sublanes; never bigger than needed for small N.
    tn = min(tile_n, _round_up(n, 8))
    grid = (pl.cdiv(n, tn),)   # partial last block handled by Pallas masking

    in_itemsize = jnp.dtype(x.dtype).itemsize
    out_itemsize = jnp.dtype(out_dtype).itemsize
    cost = pl.CostEstimate(
        flops=2 * n * k * emb,
        transcendentals=0,
        bytes_accessed=in_itemsize * (n * k + k * emb + emb) + out_itemsize * n * emb,
    )

    return pl.pallas_call(
        _bond_encoder_kernel,
        out_shape=jax.ShapeDtypeStruct((n, emb), out_dtype),
        grid=grid,
        in_specs=[
            pl.BlockSpec((tn, k), lambda i: (i, 0)),      # row-tiled activations
            pl.BlockSpec((k, emb), lambda i: (0, 0)),     # weight resident across steps
            pl.BlockSpec((1, emb), lambda i: (0, 0)),     # bias resident across steps
        ],
        out_specs=pl.BlockSpec((tn, emb), lambda i: (i, 0)),
        compiler_params=pltpu.CompilerParams(
            dimension_semantics=("parallel",),            # megacore sharding on v7x
        ),
        cost_estimate=cost,
    )(x, w_t, b2)


def init_bond_encoder_params(key, in_features, emb_dim):
    """Mimics nn.Linear.reset_parameters (uniform +/- 1/sqrt(fan_in)).

    Weight is returned already transposed to (in_features, emb_dim) so there is
    no per-call transpose in the forward hot path.
    """
    wk, bk = jax.random.split(key)
    bound = 1.0 / math.sqrt(in_features)
    w = jax.random.uniform(wk, (emb_dim, in_features), jnp.float32, -bound, bound)
    b = jax.random.uniform(bk, (emb_dim,), jnp.float32, -bound, bound)
    return jnp.transpose(w), b


def bond_encoder_reference(x, w_t, b):
    return jnp.dot(x, w_t, precision=lax.Precision.HIGHEST) + b


if __name__ == "__main__":
    key = jax.random.PRNGKey(0)

    in_features = sum(get_bond_feature_dims())   # 13
    emb_dim = 128                                 # lane-dense output width
    num_edges = 37                                # ragged N exercises the masked-tail path

    kx, kp = jax.random.split(key)
    # In the real model x is a concatenation of one-hot bond features; dense
    # random values exercise the same compute path.
    x = jax.random.normal(kx, (num_edges, in_features), jnp.float32)
    w_t, b = init_bond_encoder_params(kp, in_features, emb_dim)

    # 1) Default path (device-tuned tile, f32 output).
    fwd = jax.jit(bond_encoder_forward)
    out = jax.block_until_ready(fwd(x, w_t, b))
    ref = bond_encoder_reference(x, w_t, b)
    assert out.shape == (num_edges, emb_dim)
    assert jnp.allclose(out, ref, atol=1e-4, rtol=1e-4)

    # 2) Multi-step grid with a non-divisible N (partial last block, no pad/slice).
    n2 = 2500
    x2 = jax.random.normal(jax.random.PRNGKey(1), (n2, in_features), jnp.float32)
    fwd_small_tile = jax.jit(functools.partial(bond_encoder_forward, tile_n=1024))
    out2 = jax.block_until_ready(fwd_small_tile(x2, w_t, b))
    ref2 = bond_encoder_reference(x2, w_t, b)
    assert out2.shape == (n2, emb_dim)
    assert jnp.allclose(out2, ref2, atol=1e-4, rtol=1e-4)

    # 3) Optional bf16 output (halves the dominant HBM write traffic).
    fwd_bf16 = jax.jit(functools.partial(bond_encoder_forward, out_dtype=jnp.bfloat16))
    out_bf16 = jax.block_until_ready(fwd_bf16(x, w_t, b))
    assert out_bf16.dtype == jnp.bfloat16
    assert jnp.allclose(out_bf16.astype(jnp.float32), ref, atol=3e-2, rtol=3e-2)

    print("KERNEL_OK")
</pallas_src>

<mosaic_0001>
module attributes {stable_mosaic.version = 11 : i64} {
  func.func @_bond_encoder_kernel(%arg0: i32, %arg1: memref<40x13xf32, #tpu.memory_space<vmem>>, %arg2: memref<13x128xf32, #tpu.memory_space<vmem>>, %arg3: memref<1x128xf32, #tpu.memory_space<vmem>>, %arg4: memref<40x128xf32, #tpu.memory_space<vmem>>) attributes {dimension_semantics = [#tpu.dimension_semantics<parallel>], iteration_bounds = array<i64: 1>, scalar_prefetch = 0 : i64, scratch_operands = 0 : i64, tpu.core_type = #tpu.core_type<tc>, window_params = [{transform_indices = @transform_0, window_bounds = array<i64: 40, 13>}, {pipeline_mode = #tpu.pipeline_mode<synchronous>, transform_indices = @transform_1, window_bounds = array<i64: 13, 128>}, {pipeline_mode = #tpu.pipeline_mode<synchronous>, transform_indices = @transform_2, window_bounds = array<i64: 1, 128>}, {transform_indices = @transform_3, window_bounds = array<i64: 40, 128>}]} {
    %c0 = arith.constant 0 : index
    %c0_0 = arith.constant 0 : index
    %0 = vector.load %arg1[%c0, %c0_0] : memref<40x13xf32, #tpu.memory_space<vmem>>, vector<40x13xf32>
    %c0_1 = arith.constant 0 : index
    %c0_2 = arith.constant 0 : index
    %1 = vector.load %arg2[%c0_1, %c0_2] : memref<13x128xf32, #tpu.memory_space<vmem>>, vector<13x128xf32>
    %cst = arith.constant dense<0.000000e+00> : vector<40x128xf32>
    %2 = tpu.matmul %0, %1, %cst {dimension_numbers = #tpu.dot_dimension_numbers<[1], [0], [0], [1], [0, 0, 1, 1], [], []>, precision = #tpu.contract_precision<fp32>} : vector<40x13xf32>, vector<13x128xf32>, vector<40x128xf32> -> vector<40x128xf32>
    %c0_3 = arith.constant 0 : index
    %c0_4 = arith.constant 0 : index
    %3 = vector.load %arg3[%c0_3, %c0_4] : memref<1x128xf32, #tpu.memory_space<vmem>>, vector<1x128xf32>
    %4 = vector.broadcast %3 : vector<1x128xf32> to vector<40x128xf32>
    %5 = arith.addf %2, %4 : vector<40x128xf32>
    %c0_5 = arith.constant 0 : index
    %c0_6 = arith.constant 0 : index
    %6 = vector.load %arg4[%c0_5, %c0_6] : memref<40x128xf32, #tpu.memory_space<vmem>>, vector<40x128xf32>
    tpu.vector_store %arg4[%c0_5, %c0_6], %5 {strides = array<i32>} : memref<40x128xf32, #tpu.memory_space<vmem>>, vector<40x128xf32>,
    return
  }
  func.func @transform_0(%arg0: i32) -> (i32, i32) {
    %c0_i32 = arith.constant 0 : i32
    %c0_i32_0 = arith.constant 0 : i32
    return %arg0, %c0_i32 : i32, i32
  }
  func.func @transform_1(%arg0: i32) -> (i32, i32) {
    %c0_i32 = arith.constant 0 : i32
    %c0_i32_0 = arith.constant 0 : i32
    %c0_i32_1 = arith.constant 0 : i32
    return %c0_i32, %c0_i32_0 : i32, i32
  }
  func.func @transform_2(%arg0: i32) -> (i32, i32) {
    %c0_i32 = arith.constant 0 : i32
    %c0_i32_0 = arith.constant 0 : i32
    %c0_i32_1 = arith.constant 0 : i32
    return %c0_i32, %c0_i32_0 : i32, i32
  }
  func.func @transform_3(%arg0: i32) -> (i32, i32) {
    %c0_i32 = arith.constant 0 : i32
    %c0_i32_0 = arith.constant 0 : i32
    return %arg0, %c0_i32 : i32, i32
  }
}

</mosaic_0001>

<llo_original>
// kernel: bond_encoder_forward.1
$region0: #{bond_encoder_forward.1}
  #allocation0 [shape = 'u32[]', space=smem, size = 0x4, offset = 0x4, fixed_abs, tag = 'smem constant byte address 0x4 - core index']
  #allocation1 [shape = 'u32[144,128]{1,0:T(1,128)}', space=vmem, size = 0x12000, scoped, tag = 'internal scratch']
  %s0 = inlined_call_operand.vmem [shape: f32[37,13], index: 0, kind: input, shape index: {}]
  %s1 = inlined_call_operand.vmem [shape: f32[13,128], index: 1, kind: input, shape index: {}]
  %s2 = inlined_call_operand.vmem [shape: f32[1,128], index: 2, kind: input, shape index: {}]
  %s3 = inlined_call_operand.hbm [shape: f32[37,128], index: 3, kind: output, shape index: {}]
  %s4 = sld [smem:[#allocation0]]
  $region22: #{bond_encoder_forward.1} parent=0
    _
  %s6 = ssub.s32 1, %s4
  %s7 = scalar_select 0, %s6, %s4
  $region1: #{bond_encoder_forward.1} parent=0
    #allocation2 [shape = 'u8[20480]{0}', space=vmem, size = 0x5000, scoped, tag = 'output window, operand 0, single buffered']
    #allocation3 [shape = 's32[1]{0}', space=sflag, size = 0x4, scoped, tag = 'scoped memory for bond_encoder_forward.1']
    %8 = vsyncpa [#allocation3], 0
    // Predicated region
    $region2: #{bond_encoder_forward.1} parent=1 // pred_check
      _
    $region3: #{bond_encoder_forward.1} parent=1 // pred_check_branch
      %10 = sbr.rel (0) target = $region5
    $region4: #{bond_encoder_forward.1} parent=1 // pred_region
      _
    $region5: #{bond_encoder_forward.1} parent=1 // pred_fallthru
      _
    // Predicated region
    $region6: #{bond_encoder_forward.1} parent=1 // pred_check
      _
    $region7: #{bond_encoder_forward.1} parent=1 // pred_check_branch
      %12 = sbr.rel (0) target = $region9
    $region8: #{bond_encoder_forward.1} parent=1 // pred_region
      _
    $region9: #{bond_encoder_forward.1} parent=1 // pred_fallthru
      _
    // Predicated region
    $region10: #{bond_encoder_forward.1} parent=1 // pred_check
      _
    $region11: #{bond_encoder_forward.1} parent=1 // pred_check_branch
      %14 = sbr.rel (0) target = $region13
    $region12: #{bond_encoder_forward.1} parent=1 // pred_region
      _
    $region13: #{bond_encoder_forward.1} parent=1 // pred_fallthru
      _
    %v15 = vld [vmem:[%s0] sm:$0xff]
    %v16 = vld [vmem:[%s0 + $0x8] sm:$0xff]
    %v17 = vld [vmem:[%s0 + $0x10] sm:$0xff]
    %v18 = vld [vmem:[%s0 + $0x18] sm:$0xff]
    %v19 = vld [vmem:[%s0 + $0x20] sm:$0xff]
    %v20 = vld [vmem:[%s1] sm:$0xff]
    %v21 = vld [vmem:[%s1 + $0x8] sm:$0x1f]
    %v22 = vld [vmem:[%s2] sm:$0x1]
    %v24 = vlaneseq
    %v25 = vshrl.u32 %v24, 7
    %v26 = vsub.s32 0, %v25
    %v27 = vrot.slane %v22, %v26
    %vm29 = vcmask 105472
    %v31 = vsel %vm29, %v15, 0
    %v34 = vsel %vm29, %v16, 0
    %v37 = vsel %vm29, %v17, 0
    %v40 = vsel %vm29, %v18, 0
    %v43 = vsel %vm29, %v19, 0
    %vm45 = vcmask 1044480
    %v47 = vsel %vm45, %v21, 0
    %49 = vmatprep.subr.mxu0 0.0
    %v50 = vand.u32 %v20, 4294901760
    %51 = vmatpush1.msra.mxu0 %v50
    %52 = vmatprep.subr.mxu0 0.0
    %v53 = vand.u32 %v47, 4294901760
    %54 = vmatpush1.msra.mxu0 %v53
    %55 = vmatprep.subr.mxu0 0.0
    %56 = vmatpush1.msra.mxu0 0.0
    %57 = vmatprep.subr.mxu0 0.0
    %58 = vmatpush1.msra.mxu0 0.0
    %59 = vmatprep.subr.mxu0 0.0
    %60 = vmatpush1.msra.mxu0 0.0
    %61 = vmatprep.subr.mxu0 0.0
    %62 = vmatpush1.msra.mxu0 0.0
    %63 = vmatprep.subr.mxu0 0.0
    %64 = vmatpush1.msra.mxu0 0.0
    %65 = vmatprep.subr.mxu0 0.0
    %66 = vmatpush1.msra.mxu0 0.0
    %67 = vmatprep.subr.mxu0 0.0
    %68 = vmatpush1.msra.mxu0 0.0
    %69 = vmatprep.subr.mxu0 0.0
    %70 = vmatpush1.msra.mxu0 0.0
    %71 = vmatprep.subr.mxu0 0.0
    %72 = vmatpush1.msra.mxu0 0.0
    %73 = vmatprep.subr.mxu0 0.0
    %74 = vmatpush1.msra.mxu0 0.0
    %75 = vmatprep.subr.mxu0 0.0
    %76 = vmatpush1.msra.mxu0 0.0
    %77 = vmatprep.subr.mxu0 0.0
    %78 = vmatpush1.msra.mxu0 0.0
    %79 = vmatprep.subr.mxu0 0.0
    %80 = vmatpush1.msra.mxu0 0.0
    %81 = vmatprep.subr.mxu0 0.0
    %82 = vmatpush1.msra.mxu0 0.0
    %83 = vmatprep.subr.mxu0 0.0
    %84 = vmatpush1.msra.mxu0 0.0
    %85 = vmatprep.subr.mxu0 0.0
    %86 = vmatpush1.msra.mxu0 0.0
    %87 = vmatprep.subr.mxu0 0.0
    %88 = vmatpush1.msra.mxu0 0.0
    %89 = vmatprep.subr.mxu0 0.0
    %90 = vmatpush1.msra.mxu0 0.0
    %91 = vmatprep.subr.mxu0 0.0
    %92 = vmatpush1.msra.mxu0 0.0
    %93 = vmatprep.subr.mxu0 0.0
    %94 = vmatpush1.msra.mxu0 0.0
    %95 = vmatprep.subr.mxu0 0.0
    %96 = vmatpush1.msra.mxu0 0.0
    %97 = vmatprep.subr.mxu0 0.0
    %98 = vmatpush1.msra.mxu0 0.0
    %99 = vmatprep.subr.mxu0 0.0
    %100 = vmatpush1.msra.mxu0 0.0
    %101 = vmatprep.subr.mxu0 0.0
    %102 = vmatpush1.msra.mxu0 0.0
    %103 = vmatprep.subr.mxu0 0.0
    %104 = vmatpush1.msra.mxu0 0.0
    %105 = vmatprep.subr.mxu0 0.0
    %106 = vmatpush1.msra.mxu0 0.0
    %107 = vmatprep.subr.mxu0 0.0
    %108 = vmatpush1.msra.mxu0 0.0
    %109 = vmatprep.subr.mxu0 0.0
    %110 = vmatpush1.msra.mxu0 0.0
    %111 = vmatprep.subr.mxu0 0.0
    %112 = vmatpush1.msra.mxu0 0.0
    %113 = vmatprep.subr.mxu0 0.0
    %114 = vmatpush1.msra.mxu0 0.0
    %115 = vmatprep.mubr.f32.mxu0 0.0
    %v116 = vand.u32 %v31, 4294901760
    %v117 = vsub.f32 %v31, %v116
    %v118 = vand.u32 %v117, 4294901760
    %v119 = vsub.f32 %v117, %v118
    %v120 = vand.u32 %v119, 4294901760
    %121 = vmatmul.mubr.f32.gmra.mrb[0].mxu0 %v120
    %v122 = vpop.f32.mrb[0].mxu0
    %v123 = vadd.f32 %v27, %v122
    %v124 = vpop.f32.mrb[0].mxu0
    %125 = vmatprep.mubr.f32.mxu0 0.0
    %v126 = vand.u32 %v34, 4294901760
    %v127 = vsub.f32 %v34, %v126
    %v128 = vand.u32 %v127, 4294901760
    %v129 = vsub.f32 %v127, %v128
    %v130 = vand.u32 %v129, 4294901760
    %131 = vmatmul.mubr.f32.gmra.mrb[0].mxu0 %v130
    %v132 = vpop.f32.mrb[0].mxu0
    %v133 = vadd.f32 %v27, %v132
    %v134 = vpop.f32.mrb[0].mxu0
    %135 = vmatprep.mubr.f32.mxu0 0.0
    %v136 = vand.u32 %v37, 4294901760
    %v137 = vsub.f32 %v37, %v136
    %v138 = vand.u32 %v137, 4294901760
    %v139 = vsub.f32 %v137, %v138
    %v140 = vand.u32 %v139, 4294901760
    %141 = vmatmul.mubr.f32.gmra.mrb[0].mxu0 %v140
    %v142 = vpop.f32.mrb[0].mxu0
    %v143 = vadd.f32 %v27, %v142
    %v144 = vpop.f32.mrb[0].mxu0
    %145 = vmatprep.mubr.f32.mxu0 0.0
    %v146 = vand.u32 %v40, 4294901760
    %v147 = vsub.f32 %v40, %v146
    %v148 = vand.u32 %v147, 4294901760
    %v149 = vsub.f32 %v147, %v148
    %v150 = vand.u32 %v149, 4294901760
    %151 = vmatmul.mubr.f32.gmra.mrb[0].mxu0 %v150
    %v152 = vpop.f32.mrb[0].mxu0
    %v153 = vadd.f32 %v27, %v152
    %v154 = vpop.f32.mrb[0].mxu0
    %155 = vmatprep.mubr.f32.mxu0 0.0
    %v156 = vand.u32 %v43, 4294901760
    %v157 = vsub.f32 %v43, %v156
    %v158 = vand.u32 %v157, 4294901760
    %v159 = vsub.f32 %v157, %v158
    %v160 = vand.u32 %v159, 4294901760
    %161 = vmatmul.mubr.f32.gmra.mrb[0].mxu0 %v160
    %v162 = vpop.f32.mrb[0].mxu0
    %v163 = vadd.f32 %v27, %v162
    %v164 = vpop.f32.mrb[0].mxu0
    %165 = vdwg.mxu0
    %166 = vmatprep.subr.mxu0 0.0
    %v167 = vand.u32 %v20, 4294901760
    %v168 = vsub.f32 %v20, %v167
    %v169 = vand.u32 %v168, 4294901760
    %v170 = vsub.f32 %v168, %v169
    %v171 = vand.u32 %v170, 4294901760
    %172 = vmatpush1.msra.mxu0 %v171
    %173 = vmatprep.subr.mxu0 0.0
    %v174 = vand.u32 %v47, 4294901760
    %v175 = vsub.f32 %v47, %v174
    %v176 = vand.u32 %v175, 4294901760
    %v177 = vsub.f32 %v175, %v176
    %v178 = vand.u32 %v177, 4294901760
    %179 = vmatpush1.msra.mxu0 %v178
    %180 = vmatprep.subr.mxu0 0.0
    %181 = vmatpush1.msra.mxu0 0.0
    %182 = vmatprep.subr.mxu0 0.0
    %183 = vmatpush1.msra.mxu0 0.0
    %184 = vmatprep.subr.mxu0 0.0
    %185 = vmatpush1.msra.mxu0 0.0
    %186 = vmatprep.subr.mxu0 0.0
    %187 = vmatpush1.msra.mxu0 0.0
    %188 = vmatprep.subr.mxu0 0.0
    %189 = vmatpush1.msra.mxu0 0.0
    %190 = vmatprep.subr.mxu0 0.0
    %191 = vmatpush1.msra.mxu0 0.0
    %192 = vmatprep.subr.mxu0 0.0
    %193 = vmatpush1.msra.mxu0 0.0
    %194 = vmatprep.subr.mxu0 0.0
    %195 = vmatpush1.msra.mxu0 0.0
    %196 = vmatprep.subr.mxu0 0.0
    %197 = vmatpush1.msra.mxu0 0.0
    %198 = vmatprep.subr.mxu0 0.0
    %199 = vmatpush1.msra.mxu0 0.0
    %200 = vmatprep.subr.mxu0 0.0
    %201 = vmatpush1.msra.mxu0 0.0
    %202 = vmatprep.subr.mxu0 0.0
    %203 = vmatpush1.msra.mxu0 0.0
    %204 = vmatprep.subr.mxu0 0.0
    %205 = vmatpush1.msra.mxu0 0.0
    %206 = vmatprep.subr.mxu0 0.0
    %207 = vmatpush1.msra.mxu0 0.0
    %208 = vmatprep.subr.mxu0 0.0
    %209 = vmatpush1.msra.mxu0 0.0
    %210 = vmatprep.subr.mxu0 0.0
    %211 = vmatpush1.msra.mxu0 0.0
    %212 = vmatprep.subr.mxu0 0.0
    %213 = vmatpush1.msra.mxu0 0.0
    %214 = vmatprep.subr.mxu0 0.0
    %215 = vmatpush1.msra.mxu0 0.0
    %216 = vmatprep.subr.mxu0 0.0
    %217 = vmatpush1.msra.mxu0 0.0
    %218 = vmatprep.subr.mxu0 0.0
    %219 = vmatpush1.msra.mxu0 0.0
    %220 = vmatprep.subr.mxu0 0.0
    %221 = vmatpush1.msra.mxu0 0.0
    %222 = vmatprep.subr.mxu0 0.0
    %223 = vmatpush1.msra.mxu0 0.0
    %224 = vmatprep.subr.mxu0 0.0
    %225 = vmatpush1.msra.mxu0 0.0
    %226 = vmatprep.subr.mxu0 0.0
    %227 = vmatpush1.msra.mxu0 0.0
    %228 = vmatprep.subr.mxu0 0.0
    %229 = vmatpush1.msra.mxu0 0.0
    %230 = vmatprep.subr.mxu0 0.0
    %231 = vmatpush1.msra.mxu0 0.0
    %232 = vmatprep.subr.mxu0 0.0
    %233 = vmatpush1.msra.mxu0 0.0
    %234 = vmatprep.subr.mxu0 0.0
    %235 = vmatpush1.msra.mxu0 0.0
    %236 = vmatprep.subr.mxu0 0.0
    %237 = vmatpush1.msra.mxu0 0.0
    %238 = vmatprep.subr.mxu0 0.0
    %239 = vmatpush1.msra.mxu0 0.0
    %240 = vmatprep.mubr.f32.mxu0 0.0
    %v241 = vand.u32 %v31, 4294901760
    %242 = vmatmul.mubr.f32.gmra.mrb[0].mxu0 %v241
    %v243 = vpop.f32.mrb[0].mxu0
    %v244 = vadd.f32 %v123, %v243
    %v245 = vpop.f32.mrb[0].mxu0
    %246 = vmatprep.mubr.f32.mxu0 0.0
    %v247 = vand.u32 %v34, 4294901760
    %248 = vmatmul.mubr.f32.gmra.mrb[0].mxu0 %v247
    %v249 = vpop.f32.mrb[0].mxu0
    %v250 = vadd.f32 %v133, %v249
    %v251 = vpop.f32.mrb[0].mxu0
    %252 = vmatprep.mubr.f32.mxu0 0.0
    %v253 = vand.u32 %v37, 4294901760
    %254 = vmatmul.mubr.f32.gmra.mrb[0].mxu0 %v253
    %v255 = vpop.f32.mrb[0].mxu0
    %v256 = vadd.f32 %v143, %v255
    %v257 = vpop.f32.mrb[0].mxu0
    %258 = vmatprep.mubr.f32.mxu0 0.0
    %v259 = vand.u32 %v40, 4294901760
    %260 = vmatmul.mubr.f32.gmra.mrb[0].mxu0 %v259
    %v261 = vpop.f32.mrb[0].mxu0
    %v262 = vadd.f32 %v153, %v261
    %v263 = vpop.f32.mrb[0].mxu0
    %264 = vmatprep.mubr.f32.mxu0 0.0
    %v265 = vand.u32 %v43, 4294901760
    %266 = vmatmul.mubr.f32.gmra.mrb[0].mxu0 %v265
    %v267 = vpop.f32.mrb[0].mxu0
    %v268 = vadd.f32 %v163, %v267
    %v269 = vpop.f32.mrb[0].mxu0
    %270 = vdwg.mxu0
    %271 = vmatprep.subr.mxu0 0.0
    %v272 = vand.u32 %v20, 4294901760
    %v273 = vsub.f32 %v20, %v272
    %274 = vmatpush1.msra.mxu0 %v273
    %275 = vmatprep.subr.mxu0 0.0
    %v276 = vand.u32 %v47, 4294901760
    %v277 = vsub.f32 %v47, %v276
    %278 = vmatpush1.msra.mxu0 %v277
    %279 = vmatprep.subr.mxu0 0.0
    %280 = vmatpush1.msra.mxu0 0.0
    %281 = vmatprep.subr.mxu0 0.0
    %282 = vmatpush1.msra.mxu0 0.0
    %283 = vmatprep.subr.mxu0 0.0
    %284 = vmatpush1.msra.mxu0 0.0
    %285 = vmatprep.subr.mxu0 0.0
    %286 = vmatpush1.msra.mxu0 0.0
    %287 = vmatprep.subr.mxu0 0.0
    %288 = vmatpush1.msra.mxu0 0.0
    %289 = vmatprep.subr.mxu0 0.0
    %290 = vmatpush1.msra.mxu0 0.0
    %291 = vmatprep.subr.mxu0 0.0
    %292 = vmatpush1.msra.mxu0 0.0
    %293 = vmatprep.subr.mxu0 0.0
    %294 = vmatpush1.msra.mxu0 0.0
    %295 = vmatprep.subr.mxu0 0.0
    %296 = vmatpush1.msra.mxu0 0.0
    %297 = vmatprep.subr.mxu0 0.0
    %298 = vmatpush1.msra.mxu0 0.0
    %299 = vmatprep.subr.mxu0 0.0
    %300 = vmatpush1.msra.mxu0 0.0
    %301 = vmatprep.subr.mxu0 0.0
    %302 = vmatpush1.msra.mxu0 0.0
    %303 = vmatprep.subr.mxu0 0.0
    %304 = vmatpush1.msra.mxu0 0.0
    %305 = vmatprep.subr.mxu0 0.0
    %306 = vmatpush1.msra.mxu0 0.0
    %307 = vmatprep.subr.mxu0 0.0
    %308 = vmatpush1.msra.mxu0 0.0
    %309 = vmatprep.subr.mxu0 0.0
    %310 = vmatpush1.msra.mxu0 0.0
    %311 = vmatprep.subr.mxu0 0.0
    %312 = vmatpush1.msra.mxu0 0.0
    %313 = vmatprep.subr.mxu0 0.0
    %314 = vmatpush1.msra.mxu0 0.0
    %315 = vmatprep.subr.mxu0 0.0
    %316 = vmatpush1.msra.mxu0 0.0
    %317 = vmatprep.subr.mxu0 0.0
    %318 = vmatpush1.msra.mxu0 0.0
    %319 = vmatprep.subr.mxu0 0.0
    %320 = vmatpush1.msra.mxu0 0.0
    %321 = vmatprep.subr.mxu0 0.0
    %322 = vmatpush1.msra.mxu0 0.0
    %323 = vmatprep.subr.mxu0 0.0
    %324 = vmatpush1.msra.mxu0 0.0
    %325 = vmatprep.subr.mxu0 0.0
    %326 = vmatpush1.msra.mxu0 0.0
    %327 = vmatprep.subr.mxu0 0.0
    %328 = vmatpush1.msra.mxu0 0.0
    %329 = vmatprep.subr.mxu0 0.0
    %330 = vmatpush1.msra.mxu0 0.0
    %331 = vmatprep.subr.mxu0 0.0
    %332 = vmatpush1.msra.mxu0 0.0
    %333 = vmatprep.subr.mxu0 0.0
    %334 = vmatpush1.msra.mxu0 0.0
    %335 = vmatprep.subr.mxu0 0.0
    %336 = vmatpush1.msra.mxu0 0.0
    %337 = vmatprep.subr.mxu0 0.0
    %338 = vmatpush1.msra.mxu0 0.0
    %339 = vmatprep.mubr.f32.mxu0 0.0
    %v340 = vand.u32 %v31, 4294901760
    %v341 = vsub.f32 %v31, %v340
    %342 = vmatmul.mubr.f32.gmra.mrb[0].mxu0 %v341
    %v343 = vpop.f32.mrb[0].mxu0
    %v344 = vadd.f32 %v244, %v343
    %v345 = vpop.f32.mrb[0].mxu0
    %346 = vmatprep.mubr.f32.mxu0 0.0
    %v347 = vand.u32 %v34, 4294901760
    %v348 = vsub.f32 %v34, %v347
    %349 = vmatmul.mubr.f32.gmra.mrb[0].mxu0 %v348
    %v350 = vpop.f32.mrb[0].mxu0
    %v351 = vadd.f32 %v250, %v350
    %v352 = vpop.f32.mrb[0].mxu0
    %353 = vmatprep.mubr.f32.mxu0 0.0
    %v354 = vand.u32 %v37, 4294901760
    %v355 = vsub.f32 %v37, %v354
    %356 = vmatmul.mubr.f32.gmra.mrb[0].mxu0 %v355
    %v357 = vpop.f32.mrb[0].mxu0
    %v358 = vadd.f32 %v256, %v357
    %v359 = vpop.f32.mrb[0].mxu0
    %360 = vmatprep.mubr.f32.mxu0 0.0
    %v361 = vand.u32 %v40, 4294901760
    %v362 = vsub.f32 %v40, %v361
    %363 = vmatmul.mubr.f32.gmra.mrb[0].mxu0 %v362
    %v364 = vpop.f32.mrb[0].mxu0
    %v365 = vadd.f32 %v262, %v364
    %v366 = vpop.f32.mrb[0].mxu0
    %367 = vmatprep.mubr.f32.mxu0 0.0
    %v368 = vand.u32 %v43, 4294901760
    %v369 = vsub.f32 %v43, %v368
    %370 = vmatmul.mubr.f32.gmra.mrb[0].mxu0 %v369
    %v371 = vpop.f32.mrb[0].mxu0
    %v372 = vadd.f32 %v268, %v371
    %v373 = vpop.f32.mrb[0].mxu0
    %374 = vdwg.mxu0
    %375 = vmatprep.subr.mxu0 0.0
    %v376 = vand.u32 %v20, 4294901760
    %377 = vmatpush1.msra.mxu0 %v376
    %378 = vmatprep.subr.mxu0 0.0
    %v379 = vand.u32 %v47, 4294901760
    %380 = vmatpush1.msra.mxu0 %v379
    %381 = vmatprep.subr.mxu0 0.0
    %382 = vmatpush1.msra.mxu0 0.0
    %383 = vmatprep.subr.mxu0 0.0
    %384 = vmatpush1.msra.mxu0 0.0
    %385 = vmatprep.subr.mxu0 0.0
    %386 = vmatpush1.msra.mxu0 0.0
    %387 = vmatprep.subr.mxu0 0.0
    %388 = vmatpush1.msra.mxu0 0.0
    %389 = vmatprep.subr.mxu0 0.0
    %390 = vmatpush1.msra.mxu0 0.0
    %391 = vmatprep.subr.mxu0 0.0
    %392 = vmatpush1.msra.mxu0 0.0
    %393 = vmatprep.subr.mxu0 0.0
    %394 = vmatpush1.msra.mxu0 0.0
    %395 = vmatprep.subr.mxu0 0.0
    %396 = vmatpush1.msra.mxu0 0.0
    %397 = vmatprep.subr.mxu0 0.0
    %398 = vmatpush1.msra.mxu0 0.0
    %399 = vmatprep.subr.mxu0 0.0
    %400 = vmatpush1.msra.mxu0 0.0
    %401 = vmatprep.subr.mxu0 0.0
    %402 = vmatpush1.msra.mxu0 0.0
    %403 = vmatprep.subr.mxu0 0.0
    %404 = vmatpush1.msra.mxu0 0.0
    %405 = vmatprep.subr.mxu0 0.0
    %406 = vmatpush1.msra.mxu0 0.0
    %407 = vmatprep.subr.mxu0 0.0
    %408 = vmatpush1.msra.mxu0 0.0
    %409 = vmatprep.subr.mxu0 0.0
    %410 = vmatpush1.msra.mxu0 0.0
    %411 = vmatprep.subr.mxu0 0.0
    %412 = vmatpush1.msra.mxu0 0.0
    %413 = vmatprep.subr.mxu0 0.0
    %414 = vmatpush1.msra.mxu0 0.0
    %415 = vmatprep.subr.mxu0 0.0
    %416 = vmatpush1.msra.mxu0 0.0
    %417 = vmatprep.subr.mxu0 0.0
    %418 = vmatpush1.msra.mxu0 0.0
    %419 = vmatprep.subr.mxu0 0.0
    %420 = vmatpush1.msra.mxu0 0.0
    %421 = vmatprep.subr.mxu0 0.0
    %422 = vmatpush1.msra.mxu0 0.0
    %423 = vmatprep.subr.mxu0 0.0
    %424 = vmatpush1.msra.mxu0 0.0
    %425 = vmatprep.subr.mxu0 0.0
    %426 = vmatpush1.msra.mxu0 0.0
    %427 = vmatprep.subr.mxu0 0.0
    %428 = vmatpush1.msra.mxu0 0.0
    %429 = vmatprep.subr.mxu0 0.0
    %430 = vmatpush1.msra.mxu0 0.0
    %431 = vmatprep.subr.mxu0 0.0
    %432 = vmatpush1.msra.mxu0 0.0
    %433 = vmatprep.subr.mxu0 0.0
    %434 = vmatpush1.msra.mxu0 0.0
    %435 = vmatprep.subr.mxu0 0.0
    %436 = vmatpush1.msra.mxu0 0.0
    %437 = vmatprep.subr.mxu0 0.0
    %438 = vmatpush1.msra.mxu0 0.0
    %439 = vmatprep.subr.mxu0 0.0
    %440 = vmatpush1.msra.mxu0 0.0
    %441 = vmatprep.mubr.f32.mxu0 0.0
    %v442 = vand.u32 %v31, 4294901760
    %v443 = vsub.f32 %v31, %v442
    %v444 = vand.u32 %v443, 4294901760
    %445 = vmatmul.mubr.f32.gmra.mrb[0].mxu0 %v444
    %v446 = vpop.f32.mrb[0].mxu0
    %v447 = vadd.f32 %v344, %v446
    %v448 = vpop.f32.mrb[0].mxu0
    %449 = vmatprep.mubr.f32.mxu0 0.0
    %v450 = vand.u32 %v34, 4294901760
    %v451 = vsub.f32 %v34, %v450
    %v452 = vand.u32 %v451, 4294901760
    %453 = vmatmul.mubr.f32.gmra.mrb[0].mxu0 %v452
    %v454 = vpop.f32.mrb[0].mxu0
    %v455 = vadd.f32 %v351, %v454
    %v456 = vpop.f32.mrb[0].mxu0
    %457 = vmatprep.mubr.f32.mxu0 0.0
    %v458 = vand.u32 %v37, 4294901760
    %v459 = vsub.f32 %v37, %v458
    %v460 = vand.u32 %v459, 4294901760
    %461 = vmatmul.mubr.f32.gmra.mrb[0].mxu0 %v460
    %v462 = vpop.f32.mrb[0].mxu0
    %v463 = vadd.f32 %v358, %v462
    %v464 = vpop.f32.mrb[0].mxu0
    %465 = vmatprep.mubr.f32.mxu0 0.0
    %v466 = vand.u32 %v40, 4294901760
    %v467 = vsub.f32 %v40, %v466
    %v468 = vand.u32 %v467, 4294901760
    %469 = vmatmul.mubr.f32.gmra.mrb[0].mxu0 %v468
    %v470 = vpop.f32.mrb[0].mxu0
    %v471 = vadd.f32 %v365, %v470
    %v472 = vpop.f32.mrb[0].mxu0
    %473 = vmatprep.mubr.f32.mxu0 0.0
    %v474 = vand.u32 %v43, 4294901760
    %v475 = vsub.f32 %v43, %v474
    %v476 = vand.u32 %v475, 4294901760
    %477 = vmatmul.mubr.f32.gmra.mrb[0].mxu0 %v476
    %v478 = vpop.f32.mrb[0].mxu0
    %v479 = vadd.f32 %v372, %v478
    %v480 = vpop.f32.mrb[0].mxu0
    %481 = vdwg.mxu0
    %482 = vmatprep.subr.mxu0 0.0
    %v483 = vand.u32 %v20, 4294901760
    %v484 = vsub.f32 %v20, %v483
    %v485 = vand.u32 %v484, 4294901760
    %486 = vmatpush1.msra.mxu0 %v485
    %487 = vmatprep.subr.mxu0 0.0
    %v488 = vand.u32 %v47, 4294901760
    %v489 = vsub.f32 %v47, %v488
    %v490 = vand.u32 %v489, 4294901760
    %491 = vmatpush1.msra.mxu0 %v490
    %492 = vmatprep.subr.mxu0 0.0
    %493 = vmatpush1.msra.mxu0 0.0
    %494 = vmatprep.subr.mxu0 0.0
    %495 = vmatpush1.msra.mxu0 0.0
    %496 = vmatprep.subr.mxu0 0.0
    %497 = vmatpush1.msra.mxu0 0.0
    %498 = vmatprep.subr.mxu0 0.0
    %499 = vmatpush1.msra.mxu0 0.0
    %500 = vmatprep.subr.mxu0 0.0
    %501 = vmatpush1.msra.mxu0 0.0
    %502 = vmatprep.subr.mxu0 0.0
    %503 = vmatpush1.msra.mxu0 0.0
    %504 = vmatprep.subr.mxu0 0.0
    %505 = vmatpush1.msra.mxu0 0.0
    %506 = vmatprep.subr.mxu0 0.0
    %507 = vmatpush1.msra.mxu0 0.0
    %508 = vmatprep.subr.mxu0 0.0
    %509 = vmatpush1.msra.mxu0 0.0
    %510 = vmatprep.subr.mxu0 0.0
    %511 = vmatpush1.msra.mxu0 0.0
    %512 = vmatprep.subr.mxu0 0.0
    %513 = vmatpush1.msra.mxu0 0.0
    %514 = vmatprep.subr.mxu0 0.0
    %515 = vmatpush1.msra.mxu0 0.0
    %516 = vmatprep.subr.mxu0 0.0
    %517 = vmatpush1.msra.mxu0 0.0
    %518 = vmatprep.subr.mxu0 0.0
    %519 = vmatpush1.msra.mxu0 0.0
    %520 = vmatprep.subr.mxu0 0.0
    %521 = vmatpush1.msra.mxu0 0.0
    %522 = vmatprep.subr.mxu0 0.0
    %523 = vmatpush1.msra.mxu0 0.0
    %524 = vmatprep.subr.mxu0 0.0
    %525 = vmatpush1.msra.mxu0 0.0
    %526 = vmatprep.subr.mxu0 0.0
    %527 = vmatpush1.msra.mxu0 0.0
    %528 = vmatprep.subr.mxu0 0.0
    %529 = vmatpush1.msra.mxu0 0.0
    %530 = vmatprep.subr.mxu0 0.0
    %531 = vmatpush1.msra.mxu0 0.0
    %532 = vmatprep.subr.mxu0 0.0
    %533 = vmatpush1.msra.mxu0 0.0
    %534 = vmatprep.subr.mxu0 0.0
    %535 = vmatpush1.msra.mxu0 0.0
    %536 = vmatprep.subr.mxu0 0.0
    %537 = vmatpush1.msra.mxu0 0.0
    %538 = vmatprep.subr.mxu0 0.0
    %539 = vmatpush1.msra.mxu0 0.0
    %540 = vmatprep.subr.mxu0 0.0
    %541 = vmatpush1.msra.mxu0 0.0
    %542 = vmatprep.subr.mxu0 0.0
    %543 = vmatpush1.msra.mxu0 0.0
    %544 = vmatprep.subr.mxu0 0.0
    %545 = vmatpush1.msra.mxu0 0.0
    %546 = vmatprep.subr.mxu0 0.0
    %547 = vmatpush1.msra.mxu0 0.0
    %548 = vmatprep.subr.mxu0 0.0
    %549 = vmatpush1.msra.mxu0 0.0
    %550 = vmatprep.subr.mxu0 0.0
    %551 = vmatpush1.msra.mxu0 0.0
    %552 = vmatprep.mubr.f32.mxu0 0.0
    %v553 = vand.u32 %v31, 4294901760
    %554 = vmatmul.mubr.f32.gmra.mrb[0].mxu0 %v553
    %v555 = vpop.f32.mrb[0].mxu0
    %v556 = vadd.f32 %v447, %v555
    %v557 = vpop.f32.mrb[0].mxu0
    %558 = vmatprep.mubr.f32.mxu0 0.0
    %v559 = vand.u32 %v34, 4294901760
    %560 = vmatmul.mubr.f32.gmra.mrb[0].mxu0 %v559
    %v561 = vpop.f32.mrb[0].mxu0
    %v562 = vadd.f32 %v455, %v561
    %v563 = vpop.f32.mrb[0].mxu0
    %564 = vmatprep.mubr.f32.mxu0 0.0
    %v565 = vand.u32 %v37, 4294901760
    %566 = vmatmul.mubr.f32.gmra.mrb[0].mxu0 %v565
    %v567 = vpop.f32.mrb[0].mxu0
    %v568 = vadd.f32 %v463, %v567
    %v569 = vpop.f32.mrb[0].mxu0
    %570 = vmatprep.mubr.f32.mxu0 0.0
    %v571 = vand.u32 %v40, 4294901760
    %572 = vmatmul.mubr.f32.gmra.mrb[0].mxu0 %v571
    %v573 = vpop.f32.mrb[0].mxu0
    %v574 = vadd.f32 %v471, %v573
    %v575 = vpop.f32.mrb[0].mxu0
    %576 = vmatprep.mubr.f32.mxu0 0.0
    %v577 = vand.u32 %v43, 4294901760
    %578 = vmatmul.mubr.f32.gmra.mrb[0].mxu0 %v577
    %v579 = vpop.f32.mrb[0].mxu0
    %v580 = vadd.f32 %v479, %v579
    %v581 = vpop.f32.mrb[0].mxu0
    %582 = vdwg.mxu0
    %583 = vmatprep.subr.mxu0 0.0
    %v584 = vand.u32 %v20, 4294901760
    %585 = vmatpush1.msra.mxu0 %v584
    %586 = vmatprep.subr.mxu0 0.0
    %v587 = vand.u32 %v47, 4294901760
    %588 = vmatpush1.msra.mxu0 %v587
    %589 = vmatprep.subr.mxu0 0.0
    %590 = vmatpush1.msra.mxu0 0.0
    %591 = vmatprep.subr.mxu0 0.0
    %592 = vmatpush1.msra.mxu0 0.0
    %593 = vmatprep.subr.mxu0 0.0
    %594 = vmatpush1.msra.mxu0 0.0
    %595 = vmatprep.subr.mxu0 0.0
    %596 = vmatpush1.msra.mxu0 0.0
    %597 = vmatprep.subr.mxu0 0.0
    %598 = vmatpush1.msra.mxu0 0.0
    %599 = vmatprep.subr.mxu0 0.0
    %600 = vmatpush1.msra.mxu0 0.0
    %601 = vmatprep.subr.mxu0 0.0
    %602 = vmatpush1.msra.mxu0 0.0
    %603 = vmatprep.subr.mxu0 0.0
    %604 = vmatpush1.msra.mxu0 0.0
    %605 = vmatprep.subr.mxu0 0.0
    %606 = vmatpush1.msra.mxu0 0.0
    %607 = vmatprep.subr.mxu0 0.0
    %608 = vmatpush1.msra.mxu0 0.0
    %609 = vmatprep.subr.mxu0 0.0
    %610 = vmatpush1.msra.mxu0 0.0
    %611 = vmatprep.subr.mxu0 0.0
    %612 = vmatpush1.msra.mxu0 0.0
    %613 = vmatprep.subr.mxu0 0.0
    %614 = vmatpush1.msra.mxu0 0.0
    %615 = vmatprep.subr.mxu0 0.0
    %616 = vmatpush1.msra.mxu0 0.0
    %617 = vmatprep.subr.mxu0 0.0
    %618 = vmatpush1.msra.mxu0 0.0
    %619 = vmatprep.subr.mxu0 0.0
    %620 = vmatpush1.msra.mxu0 0.0
    %621 = vmatprep.subr.mxu0 0.0
    %622 = vmatpush1.msra.mxu0 0.0
    %623 = vmatprep.subr.mxu0 0.0
    %624 = vmatpush1.msra.mxu0 0.0
    %625 = vmatprep.subr.mxu0 0.0
    %626 = vmatpush1.msra.mxu0 0.0
    %627 = vmatprep.subr.mxu0 0.0
    %628 = vmatpush1.msra.mxu0 0.0
    %629 = vmatprep.subr.mxu0 0.0
    %630 = vmatpush1.msra.mxu0 0.0
    %631 = vmatprep.subr.mxu0 0.0
    %632 = vmatpush1.msra.mxu0 0.0
    %633 = vmatprep.subr.mxu0 0.0
    %634 = vmatpush1.msra.mxu0 0.0
    %635 = vmatprep.subr.mxu0 0.0
    %636 = vmatpush1.msra.mxu0 0.0
    %637 = vmatprep.subr.mxu0 0.0
    %638 = vmatpush1.msra.mxu0 0.0
    %639 = vmatprep.subr.mxu0 0.0
    %640 = vmatpush1.msra.mxu0 0.0
    %641 = vmatprep.subr.mxu0 0.0
    %642 = vmatpush1.msra.mxu0 0.0
    %643 = vmatprep.subr.mxu0 0.0
    %644 = vmatpush1.msra.mxu0 0.0
    %645 = vmatprep.subr.mxu0 0.0
    %646 = vmatpush1.msra.mxu0 0.0
    %647 = vmatprep.subr.mxu0 0.0
    %648 = vmatpush1.msra.mxu0 0.0
    %649 = vmatprep.mubr.f32.mxu0 0.0
    %v650 = vand.u32 %v31, 4294901760
    %651 = vmatmul.mubr.f32.gmra.mrb[0].mxu0 %v650
    %v652 = vpop.f32.mrb[0].mxu0
    %v653 = vadd.f32 %v556, %v652
    %v654 = vpop.f32.mrb[0].mxu0
    %655 = vmatprep.mubr.f32.mxu0 0.0
    %v656 = vand.u32 %v34, 4294901760
    %657 = vmatmul.mubr.f32.gmra.mrb[0].mxu0 %v656
    %v658 = vpop.f32.mrb[0].mxu0
    %v659 = vadd.f32 %v562, %v658
    %v660 = vpop.f32.mrb[0].mxu0
    %661 = vmatprep.mubr.f32.mxu0 0.0
    %v662 = vand.u32 %v37, 4294901760
    %663 = vmatmul.mubr.f32.gmra.mrb[0].mxu0 %v662
    %v664 = vpop.f32.mrb[0].mxu0
    %v665 = vadd.f32 %v568, %v664
    %v666 = vpop.f32.mrb[0].mxu0
    %667 = vmatprep.mubr.f32.mxu0 0.0
    %v668 = vand.u32 %v40, 4294901760
    %669 = vmatmul.mubr.f32.gmra.mrb[0].mxu0 %v668
    %v670 = vpop.f32.mrb[0].mxu0
    %v671 = vadd.f32 %v574, %v670
    %v672 = vpop.f32.mrb[0].mxu0
    %673 = vmatprep.mubr.f32.mxu0 0.0
    %v674 = vand.u32 %v43, 4294901760
    %675 = vmatmul.mubr.f32.gmra.mrb[0].mxu0 %v674
    %v676 = vpop.f32.mrb[0].mxu0
    %v677 = vadd.f32 %v580, %v676
    %v678 = vpop.f32.mrb[0].mxu0
    %679 = vdwg.mxu0
    %680 = vst [vmem:[#allocation2] sm:$0xff] %v653
    %681 = vst [vmem:[#allocation2 + $0x8] sm:$0xff] %v659
    %682 = vst [vmem:[#allocation2 + $0x10] sm:$0xff] %v665
    %683 = vst [vmem:[#allocation2 + $0x18] sm:$0xff] %v671
    %684 = vst [vmem:[#allocation2 + $0x20] sm:$0xff] %v677
    // Predicated region
    $region14: #{bond_encoder_forward.1} parent=1 // pred_check
      _
    $region15: #{bond_encoder_forward.1} parent=1 // pred_check_branch
      %686 = sbr.rel (0) target = $region17
    $region16: #{bond_encoder_forward.1} parent=1 // pred_region
      %s688 = ssub.s32 640, 640
      %689 = vsyncadd [#allocation3], %s688
      %s690 = sshll.u32 [#allocation2], 4
      %s691 = int_to_ptr.vmem [resolvable:$true] %s690
      %696 = dma.vmem_to_hbm [thread:$0]  %s691, 640, %s3, [#allocation3], 128, 128, 8
    $region17: #{bond_encoder_forward.1} parent=1 // pred_fallthru
      _
    // Predicated region
    $region18: #{bond_encoder_forward.1} parent=1 // pred_check
      _
    $region19: #{bond_encoder_forward.1} parent=1 // pred_check_branch
      %698 = sbr.rel (0) target = $region21
    $region20: #{bond_encoder_forward.1} parent=1 // pred_region
      %699 = dma.done [#allocation3], 640
    $region21: #{bond_encoder_forward.1} parent=1 // pred_fallthru
      _
    %700 = vsyncpa [#allocation3], 1

</llo_original>
